<compile_context>
chip_gen: v6e
topology: v6e:2x2x1
jax: 0.10.0
libtpu: 0.0.40
codegen_flags: <defaults>
</compile_context>

<pallas_src>
import functools
import math

import jax
import jax.numpy as jnp
import numpy as np
from jax.experimental import pallas as pl
from jax.experimental.pallas import tpu as pltpu


# ------------------------- parameter construction (glue) -------------------

_SIZES = (24, 7, 32, 13)       # hour, weekday, day, month (row counts)
_OFFSETS = (0, 24, 31, 63)     # row offsets inside the packed table
_FEATURE_COLS = (3, 2, 1, 0)   # x[..., col] for hour, weekday, day, month
_TABLE_ROWS = 128              # 24+7+32+13 = 76, padded to 128 (MXU-native K)
_MAX_TILE_N = 4096             # upper bound on rows per grid step
_VMEM_BUDGET = 24 * 1024 * 1024   # per-step pipelined VMEM budget (v7x-safe)
_VMEM_LIMIT = 32 * 1024 * 1024    # explicit scoped-VMEM limit (all gens OK)


def _round_up(x: int, m: int) -> int:
    return ((x + m - 1) // m) * m


def _fixed_embedding_table_np(c_in: int, d_model: int) -> np.ndarray:
    """Deterministic sinusoidal table, identical to FixedEmbedding.__init__."""
    w = np.zeros((c_in, d_model), dtype=np.float32)
    position = np.arange(0, c_in, dtype=np.float32)[:, None]
    div_term = np.exp(
        np.arange(0, d_model, 2, dtype=np.float32) * -(math.log(10000.0) / d_model)
    )
    w[:, 0::2] = np.sin(position * div_term)
    w[:, 1::2] = np.cos(position * div_term)
    return w


@functools.lru_cache(maxsize=None)
def _packed_table(d_model: int) -> jnp.ndarray:
    """(128, d_model) concat of hour|weekday|day|month tables, zero padded rows."""
    packed = np.zeros((_TABLE_ROWS, d_model), dtype=np.float32)
    row = 0
    for size in _SIZES:
        packed[row:row + size, :] = _fixed_embedding_table_np(size, d_model)
        row += size
    return jnp.asarray(packed)


# ---------------------------- tiling / VMEM planning ------------------------

def _vmem_bytes(tile_n: int, d_model: int, out_itemsize: int) -> int:
    d_lane = _round_up(d_model, 128)
    out_bufs = 2 * tile_n * d_lane * out_itemsize   # double-buffered output blocks
    idx_bufs = 2 * tile_n * 128 * 4                 # (tile_n, 4) int32 lane-pads to 128
    table = 2 * _TABLE_ROWS * d_lane * 4            # packed table (pipeline buffers)
    multihot = tile_n * 128 * 4                     # f32 temp inside kernel
    return out_bufs + idx_bufs + table + multihot


def _plan_tiles(N: int, d_model: int, out_itemsize: int):
    """Return (tile_n, n_pad): tile_n | n_pad, tile_n % 8 == 0, VMEM-safe."""
    n8 = _round_up(max(N, 1), 8)

    # Largest VMEM-safe tile (multiple of 8).
    max_tile = 8
    for t in (4096, 3584, 3072, 2560, 2048, 1536, 1024, 768, 512,
              384, 256, 128, 64, 32, 16, 8):
        if t <= _MAX_TILE_N and _vmem_bytes(t, d_model, out_itemsize) <= _VMEM_BUDGET:
            max_tile = t
            break

    # Prefer a tile that divides n8 exactly (no extra row padding, and when
    # N % 8 == 0 the post-kernel slice disappears entirely), keeping >= 2 grid
    # steps so v7x's two TensorCores both get work.
    m = n8 // 8
    best_div = 8
    d = 1
    while d * d <= m:
        if m % d == 0:
            for q in (d, m // d):
                t = 8 * q
                if t <= max_tile and (n8 // t >= 2 or n8 <= 8):
                    best_div = max(best_div, t)
        d += 1

    fallback = min(max_tile, max(8, _round_up((n8 + 1) // 2, 8)))
    if best_div >= max(8, fallback // 2):
        return best_div, n8
    # Fall back: pad rows up to a multiple of a big tile, slice after the call.
    return fallback, _round_up(n8, fallback)


# ------------------------------- Pallas kernel ------------------------------

def temporal_embed_kernel(idx_ref, tab_ref, out_ref):
    """One multi-hot matmul = sum of four embedding lookups.

    idx_ref: (tile_n, 4) int32, row offsets already added (disjoint ranges).
    tab_ref: (128, d_model) f32 packed table.
    out_ref: (tile_n, d_model) out_dtype.
    """
    idx = idx_ref[...]                                   # (tile_n, 4)
    n = idx.shape[0]
    rows = tab_ref.shape[0]                              # 128
    iota = jax.lax.broadcasted_iota(jnp.int32, (n, rows), 1)

    # Row ranges are disjoint, so OR == sum: one cast instead of 4 casts + 3 adds.
    multihot = ((idx[:, 0:1] == iota) | (idx[:, 1:2] == iota)
                | (idx[:, 2:3] == iota) | (idx[:, 3:4] == iota)
                ).astype(jnp.float32)                    # (tile_n, 128)

    out_ref[...] = jnp.dot(
        multihot, tab_ref[...], preferred_element_type=jnp.float32
    ).astype(out_ref.dtype)


# --------------------------------- wrapper ----------------------------------

def temporal_embedding(x: jnp.ndarray, d_model: int,
                       *, out_dtype=jnp.float32) -> jnp.ndarray:
    """x: (B, L, F>=4) integer time features -> (B, L, d_model) out_dtype."""
    B, L, _ = x.shape
    N = B * L
    x = x.astype(jnp.int32)

    # Pack [hour, weekday, day, month] indices into (N, 4), clamped to their
    # valid ranges (nn.Embedding would raise on OOB; we clamp) and offset into
    # the concatenated table.
    cols = []
    for col, size, off in zip(_FEATURE_COLS, _SIZES, _OFFSETS):
        cols.append(jnp.clip(x[:, :, col].reshape(N), 0, size - 1) + off)
    idx = jnp.stack(cols, axis=-1)                       # (N, 4) int32

    tab = _packed_table(d_model)                         # (128, d_model) cached

    out_itemsize = jnp.dtype(out_dtype).itemsize
    tile_n, n_pad = _plan_tiles(N, d_model, out_itemsize)
    if n_pad != N:
        idx = jnp.pad(idx, ((0, n_pad - N), (0, 0)))

    grid = (n_pad // tile_n,)

    cost = pl.CostEstimate(
        flops=2 * n_pad * _TABLE_ROWS * d_model,
        transcendentals=0,
        bytes_accessed=(n_pad * d_model * out_itemsize      # output write
                        + n_pad * 4 * 4                     # indices read
                        + _TABLE_ROWS * d_model * 4),       # table read
    )

    out = pl.pallas_call(
        temporal_embed_kernel,
        out_shape=jax.ShapeDtypeStruct((n_pad, d_model), out_dtype),
        grid=grid,
        in_specs=[
            pl.BlockSpec((tile_n, 4), lambda i: (i, 0)),             # indices
            pl.BlockSpec((_TABLE_ROWS, d_model), lambda i: (0, 0)),  # resident table
        ],
        out_specs=pl.BlockSpec((tile_n, d_model), lambda i: (i, 0)),
        compiler_params=pltpu.CompilerParams(
            dimension_semantics=("parallel",),
            vmem_limit_bytes=_VMEM_LIMIT,
        ),
        cost_estimate=cost,
    )(idx, tab)

    if n_pad != N:
        out = out[:N]
    return out.reshape(B, L, d_model)


# ------------------------------ reference (JAX) ------------------------------

def temporal_embedding_ref(x: jnp.ndarray, d_model: int) -> jnp.ndarray:
    x = x.astype(jnp.int32)
    hour_tab = jnp.asarray(_fixed_embedding_table_np(24, d_model))
    weekday_tab = jnp.asarray(_fixed_embedding_table_np(7, d_model))
    day_tab = jnp.asarray(_fixed_embedding_table_np(32, d_model))
    month_tab = jnp.asarray(_fixed_embedding_table_np(13, d_model))
    return (hour_tab[x[:, :, 3]] + weekday_tab[x[:, :, 2]]
            + day_tab[x[:, :, 1]] + month_tab[x[:, :, 0]])


# ----------------------------------- main ------------------------------------

if __name__ == "__main__":
    B, L, F, D = 2, 8, 5, 32   # batch, seq len, time-feature count, d_model

    key = jax.random.PRNGKey(0)
    k_mo, k_dy, k_wd, k_hr, k_mi = jax.random.split(key, 5)
    month = jax.random.randint(k_mo, (B, L, 1), 0, 13, dtype=jnp.int32)
    day = jax.random.randint(k_dy, (B, L, 1), 0, 32, dtype=jnp.int32)
    weekday = jax.random.randint(k_wd, (B, L, 1), 0, 7, dtype=jnp.int32)
    hour = jax.random.randint(k_hr, (B, L, 1), 0, 24, dtype=jnp.int32)
    minute = jax.random.randint(k_mi, (B, L, 1), 0, 4, dtype=jnp.int32)
    x = jnp.concatenate([month, day, weekday, hour, minute], axis=-1)  # (B,L,5)

    out = temporal_embedding(x, D)
    out = jax.block_until_ready(out)

    ref = temporal_embedding_ref(x, D)
    np.testing.assert_allclose(np.asarray(out), np.asarray(ref),
                               rtol=1e-6, atol=1e-6)
    print("KERNEL_OK")
</pallas_src>

<mosaic_0001>
module attributes {stable_mosaic.version = 11 : i64} {
  func.func @temporal_embed_kernel(%arg0: i32, %arg1: memref<8x4xi32, #tpu.memory_space<vmem>>, %arg2: memref<128x32xf32, #tpu.memory_space<vmem>>, %arg3: memref<8x32xf32, #tpu.memory_space<vmem>>) attributes {dimension_semantics = [#tpu.dimension_semantics<parallel>], iteration_bounds = array<i64: 2>, scalar_prefetch = 0 : i64, scratch_operands = 0 : i64, tpu.core_type = #tpu.core_type<tc>, window_params = [{transform_indices = @transform_0, window_bounds = array<i64: 8, 4>}, {pipeline_mode = #tpu.pipeline_mode<synchronous>, transform_indices = @transform_1, window_bounds = array<i64: 128, 32>}, {transform_indices = @transform_2, window_bounds = array<i64: 8, 32>}]} {
    %c0 = arith.constant 0 : index
    %c0_0 = arith.constant 0 : index
    %0 = vector.load %arg1[%c0, %c0_0] : memref<8x4xi32, #tpu.memory_space<vmem>>, vector<8x4xi32>
    %1 = tpu.iota {dimensions = array<i32: 1>} : vector<8x128xi32>
    %2 = vector.extract_strided_slice %0 {offsets = [0, 0], sizes = [8, 1], strides = [1, 1]} : vector<8x4xi32> to vector<8x1xi32>
    %3 = vector.broadcast %2 : vector<8x1xi32> to vector<8x128xi32>
    %4 = arith.cmpi eq, %3, %1 : vector<8x128xi32>
    %5 = vector.extract_strided_slice %0 {offsets = [0, 1], sizes = [8, 1], strides = [1, 1]} : vector<8x4xi32> to vector<8x1xi32>
    %6 = vector.broadcast %5 : vector<8x1xi32> to vector<8x128xi32>
    %7 = arith.cmpi eq, %6, %1 : vector<8x128xi32>
    %8 = arith.ori %4, %7 : vector<8x128xi1>
    %9 = vector.extract_strided_slice %0 {offsets = [0, 2], sizes = [8, 1], strides = [1, 1]} : vector<8x4xi32> to vector<8x1xi32>
    %10 = vector.broadcast %9 : vector<8x1xi32> to vector<8x128xi32>
    %11 = arith.cmpi eq, %10, %1 : vector<8x128xi32>
    %12 = arith.ori %8, %11 : vector<8x128xi1>
    %13 = vector.extract_strided_slice %0 {offsets = [0, 3], sizes = [8, 1], strides = [1, 1]} : vector<8x4xi32> to vector<8x1xi32>
    %14 = vector.broadcast %13 : vector<8x1xi32> to vector<8x128xi32>
    %15 = arith.cmpi eq, %14, %1 : vector<8x128xi32>
    %16 = arith.ori %12, %15 : vector<8x128xi1>
    %17 = arith.extui %16 : vector<8x128xi1> to vector<8x128xi32>
    %18 = arith.sitofp %17 : vector<8x128xi32> to vector<8x128xf32>
    %c0_1 = arith.constant 0 : index
    %c0_2 = arith.constant 0 : index
    %19 = vector.load %arg2[%c0_1, %c0_2] : memref<128x32xf32, #tpu.memory_space<vmem>>, vector<128x32xf32>
    %cst = arith.constant dense<0.000000e+00> : vector<8x32xf32>
    %20 = tpu.matmul %18, %19, %cst {dimension_numbers = #tpu.dot_dimension_numbers<[1], [0], [0], [1], [0, 0, 1, 1], [], []>} : vector<8x128xf32>, vector<128x32xf32>, vector<8x32xf32> -> vector<8x32xf32>
    %c0_3 = arith.constant 0 : index
    %c0_4 = arith.constant 0 : index
    %21 = vector.load %arg3[%c0_3, %c0_4] : memref<8x32xf32, #tpu.memory_space<vmem>>, vector<8x32xf32>
    tpu.vector_store %arg3[%c0_3, %c0_4], %20 {strides = array<i32>} : memref<8x32xf32, #tpu.memory_space<vmem>>, vector<8x32xf32>,
    return
  }
  func.func @transform_0(%arg0: i32) -> (i32, i32) {
    %c0_i32 = arith.constant 0 : i32
    %c0_i32_0 = arith.constant 0 : i32
    return %arg0, %c0_i32 : i32, i32
  }
  func.func @transform_1(%arg0: i32) -> (i32, i32) {
    %c0_i32 = arith.constant 0 : i32
    %c0_i32_0 = arith.constant 0 : i32
    %c0_i32_1 = arith.constant 0 : i32
    return %c0_i32, %c0_i32_0 : i32, i32
  }
  func.func @transform_2(%arg0: i32) -> (i32, i32) {
    %c0_i32 = arith.constant 0 : i32
    %c0_i32_0 = arith.constant 0 : i32
    return %arg0, %c0_i32 : i32, i32
  }
}

</mosaic_0001>

<llo_original>
// kernel: tpu_custom_call.1
$region0: #{tpu_custom_call.1}
  #allocation0 [shape = 'u32[]', space=smem, size = 0x4, offset = 0x4, fixed_abs, tag = 'smem constant byte address 0x4 - core index']
  #allocation1 [shape = 'u32[144,128]{1,0:T(1,128)}', space=vmem, size = 0x12000, scoped, tag = 'internal scratch']
  %s0 = inlined_call_operand.vmem [shape: s32[16,4], index: 0, kind: input, shape index: {}]
  %s1 = inlined_call_operand.vmem [shape: f32[128,32], index: 1, kind: input, shape index: {}]
  %s2 = inlined_call_operand.hbm [shape: f32[16,32], index: 2, kind: output, shape index: {}]
  %s3 = sld [smem:[#allocation0]]
  $region41: #{tpu_custom_call.1} parent=0
    _
  %s5 = ssub.s32 1, %s3
  %s6 = scalar_select 0, %s5, %s3
  $region1: #{tpu_custom_call.1} parent=0
    #allocation2 [shape = 'u8[8192]{0}', space=vmem, size = 0x2000, scoped, tag = 'output window, operand 0']
    #allocation3 [shape = 's32[2]{0}', space=sflag, size = 0x8, scoped, tag = 'scoped memory for tpu_custom_call.1']
    %7 = vsyncpa [#allocation3], 0
    %s8 = scalar_lea.sflag [#allocation3], 1
    %9 = vsyncpa %s8, 0
    loop: start=0, step=1, limit=4
    $region2: #{tpu_custom_call.1} parent=1 // loop_pre_header
      _
    $region3: #{tpu_custom_call.1} parent=1 // loop_header
      %s11 = sphi 0, %s15
      %p12 = scmp.ge.s32.totalorder %s11, 4
      %s21 = sphi 0, %s23
      %s24 = sphi 0, %s21
      %s25 = sphi 0, %s24
      %s41 = sphi 0, %s25
      %s45 = sphi 0, %s45
      %s47 = sphi 0, %s45
      %s48 = sphi 0, %s47
      %s62 = sphi 0, %s48
      %s68 = sphi 0, %s70
      %s71 = sphi 0, %s68
      %s72 = sphi 0, %s71
      %s88 = sphi 0, %s72
    $region4: #{tpu_custom_call.1} parent=1 // loop_header_branch
      %14 = sbr.rel (%p12) target = $region8
    $region5: #{tpu_custom_call.1} parent=1 // loop_body
      %s16 = ssub.s32 %s11, 1
      %s17 = ssub.s32 %s11, 2
      %s18 = sadd.s32 %s11, 1
      %s19 = ssub.s32 %s11, %s18
      %p20 = scmp.eq.s32.totalorder %s19, 0
      %s22 = sadd.s32 %s21, 1
      %s23 = scalar_select %p20, %s21, %s22
      %p26 = pneg %p20
      %p27 = scmp.eq.s32.totalorder %s11, 1
      %p28 = por %p26, %p27
      %p29 = scmp.ne.s32.totalorder %s21, %s24
      %p30 = scmp.eq.s32.totalorder %s11, 0
      %p31 = por %p29, %p30
      %p32 = scmp.ne.s32.totalorder %s21, %s24
      %p33 = scmp.eq.s32.totalorder %s16, 1
      %p34 = por %p32, %p33
      %p35 = scmp.ne.s32.totalorder %s24, %s25
      %p36 = scmp.eq.s32.totalorder %s16, 0
      %p37 = por %p35, %p36
      %p38 = scmp.ne.s32.totalorder %s24, %s25
      %p39 = scmp.eq.s32.totalorder %s17, 1
      %p40 = por %p38, %p39
      %p42 = scmp.ne.s32.totalorder %s25, %s41
      %p43 = scmp.eq.s32.totalorder %s17, 0
      %p44 = por %p42, %p43
      %s46 = sadd.s32 %s45, 1
      %p49 = scmp.eq.s32.totalorder %s11, 1
      %p50 = scmp.ne.s32.totalorder %s45, %s47
      %p51 = scmp.eq.s32.totalorder %s11, 0
      %p52 = por %p50, %p51
      %p53 = scmp.ne.s32.totalorder %s45, %s47
      %p54 = scmp.eq.s32.totalorder %s16, 1
      %p55 = por %p53, %p54
      %p56 = scmp.ne.s32.totalorder %s47, %s48
      %p57 = scmp.eq.s32.totalorder %s16, 0
      %p58 = por %p56, %p57
      %p59 = scmp.ne.s32.totalorder %s47, %s48
      %p60 = scmp.eq.s32.totalorder %s17, 1
      %p61 = por %p59, %p60
      %p63 = scmp.ne.s32.totalorder %s48, %s62
      %p64 = scmp.eq.s32.totalorder %s17, 0
      %p65 = por %p63, %p64
      %s66 = ssub.s32 %s11, %s18
      %p67 = scmp.eq.s32.totalorder %s66, 0
      %s69 = sadd.s32 %s68, 1
      %s70 = scalar_select %p67, %s68, %s69
      %p73 = pneg %p67
      %p74 = scmp.eq.s32.totalorder %s11, 1
      %p75 = por %p73, %p74
      %p76 = scmp.ne.s32.totalorder %s68, %s71
      %p77 = scmp.eq.s32.totalorder %s11, 0
      %p78 = por %p76, %p77
      %p79 = scmp.ne.s32.totalorder %s68, %s71
      %p80 = scmp.eq.s32.totalorder %s16, 1
      %p81 = por %p79, %p80
      %p82 = scmp.ne.s32.totalorder %s71, %s72
      %p83 = scmp.eq.s32.totalorder %s16, 0
      %p84 = por %p82, %p83
      %p85 = scmp.ne.s32.totalorder %s71, %s72
      %p86 = scmp.eq.s32.totalorder %s17, 1
      %p87 = por %p85, %p86
      %p89 = scmp.ne.s32.totalorder %s72, %s88
      %p90 = scmp.eq.s32.totalorder %s17, 0
      %p91 = por %p89, %p90
      %p92 = scmp.le.s32.totalorder 1, %s11
      %p93 = scmp.lt.s32.totalorder %s11, 3
      %p94 = pnand %p92, %p93
      %p95 = pneg %p94
      // Predicated region
      $region9: #{tpu_custom_call.1} parent=5 // pred_check
        _
      $region10: #{tpu_custom_call.1} parent=5 // pred_check_branch
        %97 = sbr.rel (%p94) target = $region12
      $region11: #{tpu_custom_call.1} parent=5 // pred_region
        %s98 = ssub.s32 %s11, 1
        // Predicated region
        $region13: #{tpu_custom_call.1} parent=11 // pred_check
          %p99 = pneg %p58
        $region14: #{tpu_custom_call.1} parent=11 // pred_check_branch
          %101 = sbr.rel (%p99) target = $region16
        $region15: #{tpu_custom_call.1} parent=11 // pred_region
          _
        $region16: #{tpu_custom_call.1} parent=11 // pred_fallthru
          _
      $region12: #{tpu_custom_call.1} parent=5 // pred_fallthru
        _
      %p102 = scmp.lt.s32.totalorder %s11, 2
      // Predicated region
      $region17: #{tpu_custom_call.1} parent=5 // pred_check
        %p103 = pneg %p102
      $region18: #{tpu_custom_call.1} parent=5 // pred_check_branch
        %105 = sbr.rel (%p103) target = $region20
      $region19: #{tpu_custom_call.1} parent=5 // pred_region
        // Predicated region
        $region21: #{tpu_custom_call.1} parent=19 // pred_check
          %p106 = pneg %p31
        $region22: #{tpu_custom_call.1} parent=19 // pred_check_branch
          %108 = sbr.rel (%p106) target = $region24
        $region23: #{tpu_custom_call.1} parent=19 // pred_region
          %p109 = scmp.lt.s32.totalorder %s11, 1
          %s110 = scalar_select %p109, %s11, 1
          %s111 = smul.addr %s110, 8
          %s112 = scalar_lea.vmem %s0, %s111
        $region24: #{tpu_custom_call.1} parent=19 // pred_fallthru
          _
      $region20: #{tpu_custom_call.1} parent=5 // pred_fallthru
        _
      %p113 = scmp.le.s32.totalorder 1, %s11
      %p114 = scmp.lt.s32.totalorder %s11, 3
      %p115 = pnand %p113, %p114
      %p116 = pneg %p115
      // Predicated region
      $region25: #{tpu_custom_call.1} parent=5 // pred_check
        _
      $region26: #{tpu_custom_call.1} parent=5 // pred_check_branch
        %118 = sbr.rel (%p115) target = $region28
      $region27: #{tpu_custom_call.1} parent=5 // pred_region
        %s119 = ssub.s32 %s11, 1
        %p120 = scmp.lt.s32.totalorder %s16, 1
        %s121 = scalar_select %p120, %s16, 1
        %s122 = smul.addr %s121, 8
        %s123 = scalar_lea.vmem %s0, %s122
        %p124 = pneg %p37
        %p125 = pneg %p34
        %p126 = pneg %p58
        %p127 = pneg %p55
        %p128 = pneg %p84
        %p129 = pneg %p81
        %s130 = sand.u32 %s71, 1
        %s131 = scalar_lea.sflag [#allocation3], %s130
        %s132 = sand.u32 %s71, 1
        %s133 = smul.addr %s132, 8
        %s134 = scalar_lea.vmem [#allocation2], %s133
        %p135 = scmp.lt.s32.totalorder %s16, 1
        %s136 = scalar_select %p135, %s16, 1
        %s137 = smul.addr %s136, 8
        %s138 = scalar_lea.vmem %s0, %s137
        %v139 = vld [vmem:[%s138] sm:$0xff]
        %v140 = vlaneseq
        %v141 = vand.u32 %v140, 127
        %142 = vset.pattern.permute.xlu0 0
        %143 = vperm.xlu0 %142, %v139
        %v144 = vpop.permute.xlu0 %143
        %vm145 = vcmp.eq.s32.totalorder %v144, %v141
        %146 = vset.pattern.permute.xlu0 1
        %147 = vperm.xlu0 %146, %v139
        %v148 = vpop.permute.xlu0 %147
        %vm149 = vcmp.eq.s32.totalorder %v148, %v141
        %vm150 = vmor %vm145, %vm149
        %151 = vset.pattern.permute.xlu0 2
        %152 = vperm.xlu0 %151, %v139
        %v153 = vpop.permute.xlu0 %152
        %vm154 = vcmp.eq.s32.totalorder %v153, %v141
        %vm155 = vmor %vm150, %vm154
        %156 = vset.pattern.permute.xlu0 3
        %157 = vperm.xlu0 %156, %v139
        %v158 = vpop.permute.xlu0 %157
        %vm159 = vcmp.eq.s32.totalorder %v158, %v141
        %vm160 = vmor %vm155, %vm159
        %v161 = vsel %vm160, 1, 0
        %v162 = vcvt.s32.f32 %v161
        %v163 = vld [vmem:[%s1] sm:$0xff]
        %v164 = vld [vmem:[%s1 + $0x8] sm:$0xff]
        %v165 = vld [vmem:[%s1 + $0x10] sm:$0xff]
        %v166 = vld [vmem:[%s1 + $0x18] sm:$0xff]
        %v167 = vld [vmem:[%s1 + $0x20] sm:$0xff]
        %v168 = vld [vmem:[%s1 + $0x28] sm:$0xff]
        %v169 = vld [vmem:[%s1 + $0x30] sm:$0xff]
        %v170 = vld [vmem:[%s1 + $0x38] sm:$0xff]
        %v171 = vld [vmem:[%s1 + $0x40] sm:$0xff]
        %v172 = vld [vmem:[%s1 + $0x48] sm:$0xff]
        %v173 = vld [vmem:[%s1 + $0x50] sm:$0xff]
        %v174 = vld [vmem:[%s1 + $0x58] sm:$0xff]
        %v175 = vld [vmem:[%s1 + $0x60] sm:$0xff]
        %v176 = vld [vmem:[%s1 + $0x68] sm:$0xff]
        %v177 = vld [vmem:[%s1 + $0x70] sm:$0xff]
        %v178 = vld [vmem:[%s1 + $0x78] sm:$0xff]
        %179 = vmatprep.subr.mxu0 0.0
        %180 = vmatpush1.msra.mxu0 %v178
        %181 = vmatprep.subr.mxu0 0.0
        %182 = vmatpush1.msra.mxu0 %v177
        %183 = vmatprep.subr.mxu0 0.0
        %184 = vmatpush1.msra.mxu0 %v176
        %185 = vmatprep.subr.mxu0 0.0
        %186 = vmatpush1.msra.mxu0 %v175
        %187 = vmatprep.subr.mxu0 0.0
        %188 = vmatpush1.msra.mxu0 %v174
        %189 = vmatprep.subr.mxu0 0.0
        %190 = vmatpush1.msra.mxu0 %v173
        %191 = vmatprep.subr.mxu0 0.0
        %192 = vmatpush1.msra.mxu0 %v172
        %193 = vmatprep.subr.mxu0 0.0
        %194 = vmatpush1.msra.mxu0 %v171
        %195 = vmatprep.subr.mxu0 0.0
        %196 = vmatpush1.msra.mxu0 %v170
        %197 = vmatprep.subr.mxu0 0.0
        %198 = vmatpush1.msra.mxu0 %v169
        %199 = vmatprep.subr.mxu0 0.0
        %200 = vmatpush1.msra.mxu0 %v168
        %201 = vmatprep.subr.mxu0 0.0
        %202 = vmatpush1.msra.mxu0 %v167
        %203 = vmatprep.subr.mxu0 0.0
        %204 = vmatpush1.msra.mxu0 %v166
        %205 = vmatprep.subr.mxu0 0.0
        %206 = vmatpush1.msra.mxu0 %v165
        %207 = vmatprep.subr.mxu0 0.0
        %208 = vmatpush1.msra.mxu0 %v164
        %209 = vmatprep.subr.mxu0 0.0
        %210 = vmatpush1.msra.mxu0 %v163
        %211 = vmatprep.subr.mxu0 0.0
        %212 = vmatpush2.msra.mxu0 0.0
        %213 = vmatprep.subr.mxu0 0.0
        %214 = vmatpush2.msra.mxu0 0.0
        %215 = vmatprep.subr.mxu0 0.0
        %216 = vmatpush2.msra.mxu0 0.0
        %217 = vmatprep.subr.mxu0 0.0
        %218 = vmatpush2.msra.mxu0 0.0
        %219 = vmatprep.subr.mxu0 0.0
        %220 = vmatpush2.msra.mxu0 0.0
        %221 = vmatprep.subr.mxu0 0.0
        %222 = vmatpush2.msra.mxu0 0.0
        %223 = vmatprep.subr.mxu0 0.0
        %224 = vmatpush2.msra.mxu0 0.0
        %225 = vmatprep.subr.mxu0 0.0
        %226 = vmatpush2.msra.mxu0 0.0
        %227 = vmatprep.subr.mxu0 0.0
        %228 = vmatpush2.msra.mxu0 0.0
        %229 = vmatprep.subr.mxu0 0.0
        %230 = vmatpush2.msra.mxu0 0.0
        %231 = vmatprep.subr.mxu0 0.0
        %232 = vmatpush2.msra.mxu0 0.0
        %233 = vmatprep.subr.mxu0 0.0
        %234 = vmatpush2.msra.mxu0 0.0
        %235 = vmatprep.subr.mxu0 0.0
        %236 = vmatpush2.msra.mxu0 0.0
        %237 = vmatprep.subr.mxu0 0.0
        %238 = vmatpush2.msra.mxu0 0.0
        %239 = vmatprep.subr.mxu0 0.0
        %240 = vmatpush2.msra.mxu0 0.0
        %241 = vmatprep.subr.mxu0 0.0
        %242 = vmatpush2.msra.mxu0 0.0
        %243 = vmatprep.mubr.f32.mxu0 0.0
        %244 = vmatmul.mubr.f32.gmra.mxu0 %v162
        %v245 = vpop.f32.mrf.mxu0
        %v246 = vadd.f32 0.0, %v245
        %v247 = vpop.f32.mrf.mxu0
        %248 = vdwg.mxu0
        %vm249 = vcmask 261120
        %250 = vst.msk [vmem:[%s134] sm:$0xff] %vm249, %v246
        %s251 = sand.u32 %s71, 1
        %s252 = scalar_lea.sflag [#allocation3], %s251
        %s253 = sand.u32 %s71, 1
        %s254 = smul.addr %s253, 8
        %s255 = scalar_lea.vmem [#allocation2], %s254
        // Predicated region
        $region29: #{tpu_custom_call.1} parent=27 // pred_check
          %p256 = pneg %p81
        $region30: #{tpu_custom_call.1} parent=27 // pred_check_branch
          %258 = sbr.rel (%p256) target = $region32
        $region31: #{tpu_custom_call.1} parent=27 // pred_region
          %s260 = ssub.s32 128, 128
          %261 = vsyncadd %s252, %s260
          %s262 = smul.addr %s16, 128
          %s263 = scalar_lea.hbm %s2, %s262
          %s265 = sshll.u32 %s255, 4
          %s266 = int_to_ptr.vmem [resolvable:$true] %s265
          %268 = dma.vmem_to_hbm [thread:$0]  %s266, 128, %s263, %s252
        $region32: #{tpu_custom_call.1} parent=27 // pred_fallthru
          _
      $region28: #{tpu_custom_call.1} parent=5 // pred_fallthru
        _
      %p269 = scmp.le.s32.totalorder 2, %s11
      // Predicated region
      $region33: #{tpu_custom_call.1} parent=5 // pred_check
        %p270 = pneg %p269
      $region34: #{tpu_custom_call.1} parent=5 // pred_check_branch
        %272 = sbr.rel (%p270) target = $region36
      $region35: #{tpu_custom_call.1} parent=5 // pred_region
        %s273 = ssub.s32 %s11, 2
        // Predicated region
        $region37: #{tpu_custom_call.1} parent=35 // pred_check
          %p274 = pneg %p87
        $region38: #{tpu_custom_call.1} parent=35 // pred_check_branch
          %276 = sbr.rel (%p274) target = $region40
        $region39: #{tpu_custom_call.1} parent=35 // pred_region
          %s277 = sand.u32 %s72, 1
          %s278 = scalar_lea.sflag [#allocation3], %s277
          %s279 = sand.u32 %s72, 1
          %s280 = smul.addr %s279, 8
          %s281 = scalar_lea.vmem [#allocation2], %s280
          %282 = dma.done %s278, 128
        $region40: #{tpu_custom_call.1} parent=35 // pred_fallthru
          _
      $region36: #{tpu_custom_call.1} parent=5 // pred_fallthru
        _
    $region6: #{tpu_custom_call.1} parent=1 // loop_footer
      %s15 = sadd.s32 1, %s11
    $region7: #{tpu_custom_call.1} parent=1 // loop_footer_branch
      %10 = sbr.rel target = $region3
    $region8: #{tpu_custom_call.1} parent=1 // loop_exit
      _
    %283 = vsyncpa [#allocation3], 1
    %s284 = scalar_lea.sflag [#allocation3], 1
    %285 = vsyncpa %s284, 1

</llo_original>
